<compile_context>
chip_gen: v6e
topology: v6e:2x2x1
jax: 0.10.0
libtpu: 0.0.40
codegen_flags: <defaults>
</compile_context>

<pallas_src>
import math
import functools

import jax
import jax.numpy as jnp
from jax.experimental import pallas as pl
from jax.experimental.pallas import tpu as pltpu


# ----------------------------------------------------------------------------
# Pallas kernel
# ----------------------------------------------------------------------------
def _conv_block_kernel(x_ref, w_ref, scale_ref, shift_ref, o_ref, *,
                       kernel_size, l_conv, pad, fuse_residual):
    """Fused Conv1d (stride-1 over pre-padded input) + BN(eval) + ReLU [+ residual].

    x_ref     : (Bt, C_in, L_pad)   pre-padded input tile (L on lanes)
    w_ref     : (K, C_out, C_in)    conv weight, tap-major (per-tap slice is a
                                    leading-dim index -> no lane slicing)
    scale_ref : (C_out, 1)          gamma / sqrt(running_var + eps)          (hoisted)
    shift_ref : (C_out, 1)          beta + (conv_bias - running_mean)*scale  (hoisted)
    o_ref     : (Bt, C_out, L_conv)
    """
    b_tile, c_in, _ = x_ref.shape

    # Hoist invariant loads out of the batch / tap loops (JAX does not CSE these).
    w_all = w_ref[...]                       # (K, C_out, C_in)
    scale = scale_ref[...]                   # (C_out, 1) -> broadcasts over lanes
    shift = shift_ref[...]
    c_out = w_all.shape[1]

    for b in range(b_tile):                  # static unroll; Bt is small
        xb = x_ref[b]                        # (C_in, L_pad)
        acc = jnp.zeros((c_out, l_conv), jnp.float32)
        for k in range(kernel_size):         # static unroll over conv taps
            xk = jax.lax.slice(xb, (0, k), (c_in, k + l_conv))        # (C_in, L_conv)
            # (C_out, C_in) @ (C_in, L_conv) on the MXU; lanes stay = L (lane-dense).
            acc = acc + jnp.dot(w_all[k], xk, preferred_element_type=jnp.float32)

        y = acc * scale + shift              # conv bias + BatchNorm fused into one FMA
        y = jnp.maximum(y, 0.0)              # ReLU
        # TODO(synk): Dropout is identity here (eval / inference mode).
        if fuse_residual:                    # static: shapes match -> fused skip add
            y = y + jax.lax.slice(xb, (0, pad), (c_in, pad + l_conv))

        o_ref[b] = y.astype(o_ref.dtype)


# ----------------------------------------------------------------------------
# Wrapper
# ----------------------------------------------------------------------------
def conv_block_pallas(x, weight, bias, gamma, beta, running_mean, running_var,
                      *, stride, padding, eps=1e-5):
    B, C_in, L = x.shape
    C_out, C_in_w, K = weight.shape
    assert C_in_w == C_in

    L_pad = L + 2 * padding
    L_conv = L_pad - K + 1                        # stride-1 conv output length
    L_out = (L_pad - K) // stride + 1             # final output length

    # Host-side prep (hoisted out of the kernel, per perf feedback):
    x_pad = jnp.pad(x, ((0, 0), (0, 0), (padding, padding))).astype(jnp.float32)
    w_kern = jnp.transpose(weight, (2, 0, 1)).astype(jnp.float32)   # (K, C_out, C_in)
    scale = (gamma / jnp.sqrt(running_var + eps)).astype(jnp.float32)
    shift = (beta + (bias - running_mean) * scale).astype(jnp.float32)
    scale2 = scale.reshape(C_out, 1)
    shift2 = shift.reshape(C_out, 1)

    fuse_residual = (stride == 1) and (C_out == C_in) and (L_conv == L)

    # Whole (small) batch per grid step to amortize per-step overhead.
    # For large B, tile the batch instead and keep the grid a multiple of 2 so the
    # v7x megacore splits it across TensorCores.
    b_tile = B
    grid = (B // b_tile,)

    kernel = functools.partial(
        _conv_block_kernel, kernel_size=K, l_conv=L_conv, pad=padding,
        fuse_residual=fuse_residual)

    out_full = pl.pallas_call(
        kernel,
        out_shape=jax.ShapeDtypeStruct((B, C_out, L_conv), jnp.float32),
        grid=grid,
        in_specs=[
            pl.BlockSpec((b_tile, C_in, L_pad), lambda i: (i, 0, 0)),   # x (padded)
            pl.BlockSpec((K, C_out, C_in), lambda i: (0, 0, 0)),        # conv weight
            pl.BlockSpec((C_out, 1), lambda i: (0, 0)),                 # fused BN scale
            pl.BlockSpec((C_out, 1), lambda i: (0, 0)),                 # fused BN shift
        ],
        out_specs=pl.BlockSpec((b_tile, C_out, L_conv), lambda i: (i, 0, 0)),
        compiler_params=pltpu.CompilerParams(
            dimension_semantics=("parallel",)),
    )(x_pad, w_kern, scale2, shift2)

    if stride == 1:
        out = out_full
    else:
        out = out_full[:, :, ::stride][:, :, :L_out]

    # Residual when shapes match but could not be fused in-kernel
    # (e.g. a strided conv that happens to preserve the shape).
    if (not fuse_residual) and out.shape == x.shape:
        out = out + x
    return out


# ----------------------------------------------------------------------------
# Pure-JAX reference (mirrors the PyTorch forward, eval mode)
# ----------------------------------------------------------------------------
def conv_block_reference(x, weight, bias, gamma, beta, mean, var,
                         *, stride, padding, eps=1e-5):
    B, C_in, L = x.shape
    C_out, _, K = weight.shape
    x_pad = jnp.pad(x, ((0, 0), (0, 0), (padding, padding)))
    L_pad = L + 2 * padding
    L_out = (L_pad - K) // stride + 1

    out = jnp.zeros((B, C_out, L_out), jnp.float32)
    for k in range(K):
        xs = jax.lax.slice(x_pad, (0, 0, k),
                           (B, C_in, k + (L_out - 1) * stride + 1),
                           strides=(1, 1, stride))
        out = out + jnp.einsum('oc,bcl->bol', weight[:, :, k], xs,
                               precision=jax.lax.Precision.HIGHEST)
    out = out + bias[None, :, None]
    out = (out - mean[None, :, None]) / jnp.sqrt(var[None, :, None] + eps)
    out = out * gamma[None, :, None] + beta[None, :, None]
    out = jnp.maximum(out, 0.0)
    # dropout identity (eval mode)
    if out.shape == x.shape:
        out = out + x
    return out


# ----------------------------------------------------------------------------
# Deterministic parameter / input construction + test
# ----------------------------------------------------------------------------
def _run_case(key, *, B, C_in, C_out, L, K, stride, padding):
    ks = jax.random.split(key, 7)
    x = jax.random.normal(ks[0], (B, C_in, L), jnp.float32)

    # nn.Conv1d-style init: uniform +-1/sqrt(fan_in), fan_in = C_in * K.
    bound = 1.0 / math.sqrt(C_in * K)
    w = jax.random.uniform(ks[1], (C_out, C_in, K), jnp.float32, -bound, bound)
    b = jax.random.uniform(ks[2], (C_out,), jnp.float32, -bound, bound)

    # BatchNorm1d (eval mode) parameters / running stats.
    gamma = 1.0 + 0.1 * jax.random.normal(ks[3], (C_out,), jnp.float32)
    beta = 0.1 * jax.random.normal(ks[4], (C_out,), jnp.float32)
    mean = 0.1 * jax.random.normal(ks[5], (C_out,), jnp.float32)
    var = jnp.abs(1.0 + 0.1 * jax.random.normal(ks[6], (C_out,), jnp.float32))

    out = conv_block_pallas(x, w, b, gamma, beta, mean, var,
                            stride=stride, padding=padding)
    out = jax.block_until_ready(out)

    ref = conv_block_reference(x, w, b, gamma, beta, mean, var,
                               stride=stride, padding=padding)
    ref = jax.block_until_ready(ref)

    assert out.shape == ref.shape, (out.shape, ref.shape)
    err = jnp.max(jnp.abs(out - ref))
    assert jnp.allclose(out, ref, rtol=2e-3, atol=2e-3), f"max abs err = {err}"


if __name__ == "__main__":
    key = jax.random.PRNGKey(0)
    k1, k2 = jax.random.split(key)

    # Case 1: residual path (in_channels == out_channels, stride 1, 'same' padding).
    _run_case(k1, B=2, C_in=8, C_out=8, L=16, K=3, stride=1, padding=1)

    # Case 2: non-residual path (channel change + stride 2).
    _run_case(k2, B=2, C_in=4, C_out=8, L=16, K=3, stride=2, padding=1)

    print("KERNEL_OK")
</pallas_src>

<mosaic_0001>
module attributes {stable_mosaic.version = 11 : i64} {
  func.func @_conv_block_kernel(%arg0: i32, %arg1: memref<2x8x18xf32, #tpu.memory_space<vmem>>, %arg2: memref<3x8x8xf32, #tpu.memory_space<vmem>>, %arg3: memref<8x1xf32, #tpu.memory_space<vmem>>, %arg4: memref<8x1xf32, #tpu.memory_space<vmem>>, %arg5: memref<2x8x16xf32, #tpu.memory_space<vmem>>) attributes {dimension_semantics = [#tpu.dimension_semantics<parallel>], iteration_bounds = array<i64: 1>, scalar_prefetch = 0 : i64, scratch_operands = 0 : i64, tpu.core_type = #tpu.core_type<tc>, window_params = [{transform_indices = @transform_0, window_bounds = array<i64: 2, 8, 18>}, {pipeline_mode = #tpu.pipeline_mode<synchronous>, transform_indices = @transform_1, window_bounds = array<i64: 3, 8, 8>}, {pipeline_mode = #tpu.pipeline_mode<synchronous>, transform_indices = @transform_2, window_bounds = array<i64: 8, 1>}, {pipeline_mode = #tpu.pipeline_mode<synchronous>, transform_indices = @transform_3, window_bounds = array<i64: 8, 1>}, {transform_indices = @transform_4, window_bounds = array<i64: 2, 8, 16>}]} {
    %c0 = arith.constant 0 : index
    %c0_0 = arith.constant 0 : index
    %c0_1 = arith.constant 0 : index
    %0 = vector.load %arg2[%c0, %c0_0, %c0_1] : memref<3x8x8xf32, #tpu.memory_space<vmem>>, vector<3x8x8xf32>
    %c0_2 = arith.constant 0 : index
    %c0_3 = arith.constant 0 : index
    %1 = vector.load %arg3[%c0_2, %c0_3] : memref<8x1xf32, #tpu.memory_space<vmem>>, vector<8x1xf32>
    %c0_4 = arith.constant 0 : index
    %c0_5 = arith.constant 0 : index
    %2 = vector.load %arg4[%c0_4, %c0_5] : memref<8x1xf32, #tpu.memory_space<vmem>>, vector<8x1xf32>
    %c0_6 = arith.constant 0 : index
    %c0_7 = arith.constant 0 : index
    %c0_8 = arith.constant 0 : index
    %3 = vector.load %arg1[%c0_6, %c0_7, %c0_8] : memref<2x8x18xf32, #tpu.memory_space<vmem>>, vector<1x8x18xf32>
    %4 = vector.shape_cast %3 : vector<1x8x18xf32> to vector<8x18xf32>
    %cst = arith.constant 0.000000e+00 : f32
    %5 = vector.broadcast %cst : f32 to vector<8x16xf32>
    %6 = vector.extract_strided_slice %4 {offsets = [0, 0], sizes = [8, 16], strides = [1, 1]} : vector<8x18xf32> to vector<8x16xf32>
    %7 = vector.extract_strided_slice %0 {offsets = [0, 0, 0], sizes = [1, 8, 8], strides = [1, 1, 1]} : vector<3x8x8xf32> to vector<1x8x8xf32>
    %8 = vector.shape_cast %7 : vector<1x8x8xf32> to vector<8x8xf32>
    %cst_9 = arith.constant dense<0.000000e+00> : vector<8x16xf32>
    %9 = tpu.matmul %8, %6, %cst_9 {dimension_numbers = #tpu.dot_dimension_numbers<[1], [0], [0], [1], [0, 0, 1, 1], [], []>} : vector<8x8xf32>, vector<8x16xf32>, vector<8x16xf32> -> vector<8x16xf32>
    %10 = arith.addf %5, %9 : vector<8x16xf32>
    %11 = vector.extract_strided_slice %4 {offsets = [0, 1], sizes = [8, 16], strides = [1, 1]} : vector<8x18xf32> to vector<8x16xf32>
    %12 = vector.extract_strided_slice %0 {offsets = [1, 0, 0], sizes = [1, 8, 8], strides = [1, 1, 1]} : vector<3x8x8xf32> to vector<1x8x8xf32>
    %13 = vector.shape_cast %12 : vector<1x8x8xf32> to vector<8x8xf32>
    %cst_10 = arith.constant dense<0.000000e+00> : vector<8x16xf32>
    %14 = tpu.matmul %13, %11, %cst_10 {dimension_numbers = #tpu.dot_dimension_numbers<[1], [0], [0], [1], [0, 0, 1, 1], [], []>} : vector<8x8xf32>, vector<8x16xf32>, vector<8x16xf32> -> vector<8x16xf32>
    %15 = arith.addf %10, %14 : vector<8x16xf32>
    %16 = vector.extract_strided_slice %4 {offsets = [0, 2], sizes = [8, 16], strides = [1, 1]} : vector<8x18xf32> to vector<8x16xf32>
    %17 = vector.extract_strided_slice %0 {offsets = [2, 0, 0], sizes = [1, 8, 8], strides = [1, 1, 1]} : vector<3x8x8xf32> to vector<1x8x8xf32>
    %18 = vector.shape_cast %17 : vector<1x8x8xf32> to vector<8x8xf32>
    %cst_11 = arith.constant dense<0.000000e+00> : vector<8x16xf32>
    %19 = tpu.matmul %18, %16, %cst_11 {dimension_numbers = #tpu.dot_dimension_numbers<[1], [0], [0], [1], [0, 0, 1, 1], [], []>} : vector<8x8xf32>, vector<8x16xf32>, vector<8x16xf32> -> vector<8x16xf32>
    %20 = arith.addf %15, %19 : vector<8x16xf32>
    %21 = vector.broadcast %1 : vector<8x1xf32> to vector<8x16xf32>
    %22 = arith.mulf %20, %21 : vector<8x16xf32>
    %23 = vector.broadcast %2 : vector<8x1xf32> to vector<8x16xf32>
    %24 = arith.addf %22, %23 : vector<8x16xf32>
    %cst_12 = arith.constant 0.000000e+00 : f32
    %25 = vector.broadcast %cst_12 : f32 to vector<8x16xf32>
    %26 = arith.maximumf %24, %25 : vector<8x16xf32>
    %27 = vector.extract_strided_slice %4 {offsets = [0, 1], sizes = [8, 16], strides = [1, 1]} : vector<8x18xf32> to vector<8x16xf32>
    %28 = arith.addf %26, %27 : vector<8x16xf32>
    %c0_13 = arith.constant 0 : index
    %c0_14 = arith.constant 0 : index
    %c0_15 = arith.constant 0 : index
    %29 = vector.load %arg5[%c0_13, %c0_14, %c0_15] : memref<2x8x16xf32, #tpu.memory_space<vmem>>, vector<1x8x16xf32>
    %30 = vector.shape_cast %29 : vector<1x8x16xf32> to vector<8x16xf32>
    %31 = vector.shape_cast %28 : vector<8x16xf32> to vector<1x8x16xf32>
    tpu.vector_store %arg5[%c0_13, %c0_14, %c0_15], %31 {strides = array<i32>} : memref<2x8x16xf32, #tpu.memory_space<vmem>>, vector<1x8x16xf32>,
    %c1 = arith.constant 1 : index
    %c0_16 = arith.constant 0 : index
    %c0_17 = arith.constant 0 : index
    %32 = vector.load %arg1[%c1, %c0_16, %c0_17] : memref<2x8x18xf32, #tpu.memory_space<vmem>>, vector<1x8x18xf32>
    %33 = vector.shape_cast %32 : vector<1x8x18xf32> to vector<8x18xf32>
    %cst_18 = arith.constant 0.000000e+00 : f32
    %34 = vector.broadcast %cst_18 : f32 to vector<8x16xf32>
    %35 = vector.extract_strided_slice %33 {offsets = [0, 0], sizes = [8, 16], strides = [1, 1]} : vector<8x18xf32> to vector<8x16xf32>
    %36 = vector.extract_strided_slice %0 {offsets = [0, 0, 0], sizes = [1, 8, 8], strides = [1, 1, 1]} : vector<3x8x8xf32> to vector<1x8x8xf32>
    %37 = vector.shape_cast %36 : vector<1x8x8xf32> to vector<8x8xf32>
    %cst_19 = arith.constant dense<0.000000e+00> : vector<8x16xf32>
    %38 = tpu.matmul %37, %35, %cst_19 {dimension_numbers = #tpu.dot_dimension_numbers<[1], [0], [0], [1], [0, 0, 1, 1], [], []>} : vector<8x8xf32>, vector<8x16xf32>, vector<8x16xf32> -> vector<8x16xf32>
    %39 = arith.addf %34, %38 : vector<8x16xf32>
    %40 = vector.extract_strided_slice %33 {offsets = [0, 1], sizes = [8, 16], strides = [1, 1]} : vector<8x18xf32> to vector<8x16xf32>
    %41 = vector.extract_strided_slice %0 {offsets = [1, 0, 0], sizes = [1, 8, 8], strides = [1, 1, 1]} : vector<3x8x8xf32> to vector<1x8x8xf32>
    %42 = vector.shape_cast %41 : vector<1x8x8xf32> to vector<8x8xf32>
    %cst_20 = arith.constant dense<0.000000e+00> : vector<8x16xf32>
    %43 = tpu.matmul %42, %40, %cst_20 {dimension_numbers = #tpu.dot_dimension_numbers<[1], [0], [0], [1], [0, 0, 1, 1], [], []>} : vector<8x8xf32>, vector<8x16xf32>, vector<8x16xf32> -> vector<8x16xf32>
    %44 = arith.addf %39, %43 : vector<8x16xf32>
    %45 = vector.extract_strided_slice %33 {offsets = [0, 2], sizes = [8, 16], strides = [1, 1]} : vector<8x18xf32> to vector<8x16xf32>
    %46 = vector.extract_strided_slice %0 {offsets = [2, 0, 0], sizes = [1, 8, 8], strides = [1, 1, 1]} : vector<3x8x8xf32> to vector<1x8x8xf32>
    %47 = vector.shape_cast %46 : vector<1x8x8xf32> to vector<8x8xf32>
    %cst_21 = arith.constant dense<0.000000e+00> : vector<8x16xf32>
    %48 = tpu.matmul %47, %45, %cst_21 {dimension_numbers = #tpu.dot_dimension_numbers<[1], [0], [0], [1], [0, 0, 1, 1], [], []>} : vector<8x8xf32>, vector<8x16xf32>, vector<8x16xf32> -> vector<8x16xf32>
    %49 = arith.addf %44, %48 : vector<8x16xf32>
    %50 = vector.broadcast %1 : vector<8x1xf32> to vector<8x16xf32>
    %51 = arith.mulf %49, %50 : vector<8x16xf32>
    %52 = vector.broadcast %2 : vector<8x1xf32> to vector<8x16xf32>
    %53 = arith.addf %51, %52 : vector<8x16xf32>
    %cst_22 = arith.constant 0.000000e+00 : f32
    %54 = vector.broadcast %cst_22 : f32 to vector<8x16xf32>
    %55 = arith.maximumf %53, %54 : vector<8x16xf32>
    %56 = vector.extract_strided_slice %33 {offsets = [0, 1], sizes = [8, 16], strides = [1, 1]} : vector<8x18xf32> to vector<8x16xf32>
    %57 = arith.addf %55, %56 : vector<8x16xf32>
    %c1_23 = arith.constant 1 : index
    %c0_24 = arith.constant 0 : index
    %c0_25 = arith.constant 0 : index
    %58 = vector.load %arg5[%c1_23, %c0_24, %c0_25] : memref<2x8x16xf32, #tpu.memory_space<vmem>>, vector<1x8x16xf32>
    %59 = vector.shape_cast %58 : vector<1x8x16xf32> to vector<8x16xf32>
    %60 = vector.shape_cast %57 : vector<8x16xf32> to vector<1x8x16xf32>
    tpu.vector_store %arg5[%c1_23, %c0_24, %c0_25], %60 {strides = array<i32>} : memref<2x8x16xf32, #tpu.memory_space<vmem>>, vector<1x8x16xf32>,
    return
  }
  func.func @transform_0(%arg0: i32) -> (i32, i32, i32) {
    %c0_i32 = arith.constant 0 : i32
    %c0_i32_0 = arith.constant 0 : i32
    %c0_i32_1 = arith.constant 0 : i32
    return %arg0, %c0_i32, %c0_i32_0 : i32, i32, i32
  }
  func.func @transform_1(%arg0: i32) -> (i32, i32, i32) {
    %c0_i32 = arith.constant 0 : i32
    %c0_i32_0 = arith.constant 0 : i32
    %c0_i32_1 = arith.constant 0 : i32
    %c0_i32_2 = arith.constant 0 : i32
    return %c0_i32, %c0_i32_0, %c0_i32_1 : i32, i32, i32
  }
  func.func @transform_2(%arg0: i32) -> (i32, i32) {
    %c0_i32 = arith.constant 0 : i32
    %c0_i32_0 = arith.constant 0 : i32
    %c0_i32_1 = arith.constant 0 : i32
    return %c0_i32, %c0_i32_0 : i32, i32
  }
  func.func @transform_3(%arg0: i32) -> (i32, i32) {
    %c0_i32 = arith.constant 0 : i32
    %c0_i32_0 = arith.constant 0 : i32
    %c0_i32_1 = arith.constant 0 : i32
    return %c0_i32, %c0_i32_0 : i32, i32
  }
  func.func @transform_4(%arg0: i32) -> (i32, i32, i32) {
    %c0_i32 = arith.constant 0 : i32
    %c0_i32_0 = arith.constant 0 : i32
    %c0_i32_1 = arith.constant 0 : i32
    return %arg0, %c0_i32, %c0_i32_0 : i32, i32, i32
  }
}

</mosaic_0001>

<llo_original>
// kernel: tpu_custom_call.1
$region0: #{tpu_custom_call.1}
  #allocation0 [shape = 'u32[]', space=smem, size = 0x4, offset = 0x4, fixed_abs, tag = 'smem constant byte address 0x4 - core index']
  #allocation1 [shape = 'u32[144,128]{1,0:T(1,128)}', space=vmem, size = 0x12000, scoped, tag = 'internal scratch']
  %s0 = inlined_call_operand.vmem [shape: f32[2,8,18], index: 0, kind: input, shape index: {}]
  %s1 = inlined_call_operand.hbm [shape: f32[3,8,8], index: 1, kind: input, shape index: {}]
  %s2 = inlined_call_operand.vmem [shape: f32[8,1], index: 2, kind: input, shape index: {}]
  %s3 = inlined_call_operand.vmem [shape: f32[8,1], index: 3, kind: input, shape index: {}]
  %s4 = inlined_call_operand.hbm [shape: f32[2,8,16], index: 4, kind: output, shape index: {}]
  %s5 = sld [smem:[#allocation0]]
  $region30: #{tpu_custom_call.1} parent=0
    _
  %s7 = ssub.s32 1, %s5
  %s8 = scalar_select 0, %s7, %s5
  $region1: #{tpu_custom_call.1} parent=0
    #allocation2 [shape = 'u8[12288]{0}', space=vmem, size = 0x3000, scoped, tag = 'input window, operand 1, single buffered']
    #allocation3 [shape = 's32[1]{0}', space=sflag, size = 0x4, scoped, tag = 'scoped memory for tpu_custom_call.1']
    #allocation4 [shape = 's32[1]{0}', space=sflag, size = 0x4, scoped, tag = 'scoped memory for tpu_custom_call.1']
    #allocation5 [shape = 'u8[8192]{0}', space=vmem, size = 0x2000, scoped, tag = 'output window, operand 0, single buffered']
    %9 = vsyncpa [#allocation3], 0
    %10 = vsyncpa [#allocation4], 0
    // Predicated region
    $region2: #{tpu_custom_call.1} parent=1 // pred_check
      _
    $region3: #{tpu_custom_call.1} parent=1 // pred_check_branch
      %12 = sbr.rel (0) target = $region5
    $region4: #{tpu_custom_call.1} parent=1 // pred_region
      _
    $region5: #{tpu_custom_call.1} parent=1 // pred_fallthru
      _
    // Predicated region
    $region6: #{tpu_custom_call.1} parent=1 // pred_check
      _
    $region7: #{tpu_custom_call.1} parent=1 // pred_check_branch
      %14 = sbr.rel (0) target = $region9
    $region8: #{tpu_custom_call.1} parent=1 // pred_region
      %s16 = ssub.s32 384, 384
      %17 = vsyncadd [#allocation3], %s16
      %s18 = sshll.u32 [#allocation2], 4
      %s19 = int_to_ptr.vmem [resolvable:$true] %s18
      %24 = dma.hbm_to_vmem [thread:$0]  %s1, 384, %s19, [#allocation3], 128, 128, 8
    $region9: #{tpu_custom_call.1} parent=1 // pred_fallthru
      _
    // Predicated region
    $region10: #{tpu_custom_call.1} parent=1 // pred_check
      _
    $region11: #{tpu_custom_call.1} parent=1 // pred_check_branch
      %26 = sbr.rel (0) target = $region13
    $region12: #{tpu_custom_call.1} parent=1 // pred_region
      _
    $region13: #{tpu_custom_call.1} parent=1 // pred_fallthru
      _
    // Predicated region
    $region14: #{tpu_custom_call.1} parent=1 // pred_check
      _
    $region15: #{tpu_custom_call.1} parent=1 // pred_check_branch
      %28 = sbr.rel (0) target = $region17
    $region16: #{tpu_custom_call.1} parent=1 // pred_region
      _
    $region17: #{tpu_custom_call.1} parent=1 // pred_fallthru
      _
    // Predicated region
    $region18: #{tpu_custom_call.1} parent=1 // pred_check
      _
    $region19: #{tpu_custom_call.1} parent=1 // pred_check_branch
      %30 = sbr.rel (0) target = $region21
    $region20: #{tpu_custom_call.1} parent=1 // pred_region
      %31 = dma.done [#allocation3], 384
    $region21: #{tpu_custom_call.1} parent=1 // pred_fallthru
      _
    %v32 = vld [vmem:[#allocation2] sm:$0xff]
    %v33 = vld [vmem:[#allocation2 + $0x8] sm:$0xff]
    %v34 = vld [vmem:[#allocation2 + $0x10] sm:$0xff]
    %v35 = vld [vmem:[%s2] sm:$0xff]
    %v36 = vld [vmem:[%s3] sm:$0xff]
    %v37 = vld [vmem:[%s0] sm:$0xff]
    %39 = vrot.lane.b32.xlu0 %v37, 127
    %v40 = vpop.permute.xlu0 %39
    %vm42 = vcmask 64512
    %v44 = vsel %vm42, %v33, 0
    %46 = vmatprep.subr.mxu0 0.0
    %47 = vmatpush1.msra.mxu0 0.0
    %48 = vmatprep.subr.mxu0 0.0
    %49 = vmatpush1.msra.mxu0 0.0
    %50 = vmatprep.subr.mxu0 0.0
    %51 = vmatpush1.msra.mxu0 0.0
    %52 = vmatprep.subr.mxu0 0.0
    %53 = vmatpush1.msra.mxu0 0.0
    %54 = vmatprep.subr.mxu0 0.0
    %55 = vmatpush1.msra.mxu0 0.0
    %56 = vmatprep.subr.mxu0 0.0
    %57 = vmatpush1.msra.mxu0 0.0
    %58 = vmatprep.subr.mxu0 0.0
    %59 = vmatpush1.msra.mxu0 0.0
    %60 = vmatprep.subr.mxu0 0.0
    %61 = vmatpush1.msra.mxu0 0.0
    %62 = vmatprep.subr.mxu0 0.0
    %63 = vmatpush1.msra.mxu0 0.0
    %64 = vmatprep.subr.mxu0 0.0
    %65 = vmatpush1.msra.mxu0 0.0
    %66 = vmatprep.subr.mxu0 0.0
    %67 = vmatpush1.msra.mxu0 0.0
    %68 = vmatprep.subr.mxu0 0.0
    %69 = vmatpush1.msra.mxu0 0.0
    %70 = vmatprep.subr.mxu0 0.0
    %71 = vmatpush1.msra.mxu0 0.0
    %72 = vmatprep.subr.mxu0 0.0
    %73 = vmatpush1.msra.mxu0 0.0
    %74 = vmatprep.subr.mxu0 0.0
    %75 = vmatpush1.msra.mxu0 0.0
    %76 = vmatprep.subr.mxu0 0.0
    %77 = vmatpush1.msra.mxu0 %v40
    %78 = vmatprep.subr.mxu0 0.0
    %79 = vmatpush2.msra.mxu0 0.0
    %80 = vmatprep.subr.mxu0 0.0
    %81 = vmatpush2.msra.mxu0 0.0
    %82 = vmatprep.subr.mxu0 0.0
    %83 = vmatpush2.msra.mxu0 0.0
    %84 = vmatprep.subr.mxu0 0.0
    %85 = vmatpush2.msra.mxu0 0.0
    %86 = vmatprep.subr.mxu0 0.0
    %87 = vmatpush2.msra.mxu0 0.0
    %88 = vmatprep.subr.mxu0 0.0
    %89 = vmatpush2.msra.mxu0 0.0
    %90 = vmatprep.subr.mxu0 0.0
    %91 = vmatpush2.msra.mxu0 0.0
    %92 = vmatprep.subr.mxu0 0.0
    %93 = vmatpush2.msra.mxu0 0.0
    %94 = vmatprep.subr.mxu0 0.0
    %95 = vmatpush2.msra.mxu0 0.0
    %96 = vmatprep.subr.mxu0 0.0
    %97 = vmatpush2.msra.mxu0 0.0
    %98 = vmatprep.subr.mxu0 0.0
    %99 = vmatpush2.msra.mxu0 0.0
    %100 = vmatprep.subr.mxu0 0.0
    %101 = vmatpush2.msra.mxu0 0.0
    %102 = vmatprep.subr.mxu0 0.0
    %103 = vmatpush2.msra.mxu0 0.0
    %104 = vmatprep.subr.mxu0 0.0
    %105 = vmatpush2.msra.mxu0 0.0
    %106 = vmatprep.subr.mxu0 0.0
    %107 = vmatpush2.msra.mxu0 0.0
    %108 = vmatprep.subr.mxu0 0.0
    %109 = vmatpush2.msra.mxu0 0.0
    %110 = vmatprep.mubr.f32.mxu0 0.0
    %111 = vmatmul.mubr.f32.gmra.mxu0 %v44
    %v112 = vpop.f32.mrf.mxu0
    %v113 = vadd.f32 0.0, %v112
    %v114 = vpop.f32.mrf.mxu0
    %115 = vdwg.mxu0
    %v117 = vsel %vm42, %v32, 0
    %119 = vmatprep.subr.mxu0 0.0
    %120 = vmatpush1.msra.mxu0 0.0
    %121 = vmatprep.subr.mxu0 0.0
    %122 = vmatpush1.msra.mxu0 0.0
    %123 = vmatprep.subr.mxu0 0.0
    %124 = vmatpush1.msra.mxu0 0.0
    %125 = vmatprep.subr.mxu0 0.0
    %126 = vmatpush1.msra.mxu0 0.0
    %127 = vmatprep.subr.mxu0 0.0
    %128 = vmatpush1.msra.mxu0 0.0
    %129 = vmatprep.subr.mxu0 0.0
    %130 = vmatpush1.msra.mxu0 0.0
    %131 = vmatprep.subr.mxu0 0.0
    %132 = vmatpush1.msra.mxu0 0.0
    %133 = vmatprep.subr.mxu0 0.0
    %134 = vmatpush1.msra.mxu0 0.0
    %135 = vmatprep.subr.mxu0 0.0
    %136 = vmatpush1.msra.mxu0 0.0
    %137 = vmatprep.subr.mxu0 0.0
    %138 = vmatpush1.msra.mxu0 0.0
    %139 = vmatprep.subr.mxu0 0.0
    %140 = vmatpush1.msra.mxu0 0.0
    %141 = vmatprep.subr.mxu0 0.0
    %142 = vmatpush1.msra.mxu0 0.0
    %143 = vmatprep.subr.mxu0 0.0
    %144 = vmatpush1.msra.mxu0 0.0
    %145 = vmatprep.subr.mxu0 0.0
    %146 = vmatpush1.msra.mxu0 0.0
    %147 = vmatprep.subr.mxu0 0.0
    %148 = vmatpush1.msra.mxu0 0.0
    %149 = vmatprep.subr.mxu0 0.0
    %150 = vmatpush1.msra.mxu0 %v37
    %151 = vmatprep.subr.mxu0 0.0
    %152 = vmatpush2.msra.mxu0 0.0
    %153 = vmatprep.subr.mxu0 0.0
    %154 = vmatpush2.msra.mxu0 0.0
    %155 = vmatprep.subr.mxu0 0.0
    %156 = vmatpush2.msra.mxu0 0.0
    %157 = vmatprep.subr.mxu0 0.0
    %158 = vmatpush2.msra.mxu0 0.0
    %159 = vmatprep.subr.mxu0 0.0
    %160 = vmatpush2.msra.mxu0 0.0
    %161 = vmatprep.subr.mxu0 0.0
    %162 = vmatpush2.msra.mxu0 0.0
    %163 = vmatprep.subr.mxu0 0.0
    %164 = vmatpush2.msra.mxu0 0.0
    %165 = vmatprep.subr.mxu0 0.0
    %166 = vmatpush2.msra.mxu0 0.0
    %167 = vmatprep.subr.mxu0 0.0
    %168 = vmatpush2.msra.mxu0 0.0
    %169 = vmatprep.subr.mxu0 0.0
    %170 = vmatpush2.msra.mxu0 0.0
    %171 = vmatprep.subr.mxu0 0.0
    %172 = vmatpush2.msra.mxu0 0.0
    %173 = vmatprep.subr.mxu0 0.0
    %174 = vmatpush2.msra.mxu0 0.0
    %175 = vmatprep.subr.mxu0 0.0
    %176 = vmatpush2.msra.mxu0 0.0
    %177 = vmatprep.subr.mxu0 0.0
    %178 = vmatpush2.msra.mxu0 0.0
    %179 = vmatprep.subr.mxu0 0.0
    %180 = vmatpush2.msra.mxu0 0.0
    %181 = vmatprep.subr.mxu0 0.0
    %182 = vmatpush2.msra.mxu0 0.0
    %183 = vmatprep.mubr.f32.mxu0 0.0
    %184 = vmatmul.mubr.f32.gmra.mxu0 %v117
    %v185 = vpop.f32.mrf.mxu0
    %v186 = vadd.f32 %v113, %v185
    %v187 = vpop.f32.mrf.mxu0
    %188 = vdwg.mxu0
    %189 = vrot.lane.b32.xlu0 %v37, 126
    %v190 = vpop.permute.xlu0 %189
    %v193 = vsel %vm42, %v34, 0
    %195 = vmatprep.subr.mxu0 0.0
    %196 = vmatpush1.msra.mxu0 0.0
    %197 = vmatprep.subr.mxu0 0.0
    %198 = vmatpush1.msra.mxu0 0.0
    %199 = vmatprep.subr.mxu0 0.0
    %200 = vmatpush1.msra.mxu0 0.0
    %201 = vmatprep.subr.mxu0 0.0
    %202 = vmatpush1.msra.mxu0 0.0
    %203 = vmatprep.subr.mxu0 0.0
    %204 = vmatpush1.msra.mxu0 0.0
    %205 = vmatprep.subr.mxu0 0.0
    %206 = vmatpush1.msra.mxu0 0.0
    %207 = vmatprep.subr.mxu0 0.0
    %208 = vmatpush1.msra.mxu0 0.0
    %209 = vmatprep.subr.mxu0 0.0
    %210 = vmatpush1.msra.mxu0 0.0
    %211 = vmatprep.subr.mxu0 0.0
    %212 = vmatpush1.msra.mxu0 0.0
    %213 = vmatprep.subr.mxu0 0.0
    %214 = vmatpush1.msra.mxu0 0.0
    %215 = vmatprep.subr.mxu0 0.0
    %216 = vmatpush1.msra.mxu0 0.0
    %217 = vmatprep.subr.mxu0 0.0
    %218 = vmatpush1.msra.mxu0 0.0
    %219 = vmatprep.subr.mxu0 0.0
    %220 = vmatpush1.msra.mxu0 0.0
    %221 = vmatprep.subr.mxu0 0.0
    %222 = vmatpush1.msra.mxu0 0.0
    %223 = vmatprep.subr.mxu0 0.0
    %224 = vmatpush1.msra.mxu0 0.0
    %225 = vmatprep.subr.mxu0 0.0
    %226 = vmatpush1.msra.mxu0 %v190
    %227 = vmatprep.subr.mxu0 0.0
    %228 = vmatpush2.msra.mxu0 0.0
    %229 = vmatprep.subr.mxu0 0.0
    %230 = vmatpush2.msra.mxu0 0.0
    %231 = vmatprep.subr.mxu0 0.0
    %232 = vmatpush2.msra.mxu0 0.0
    %233 = vmatprep.subr.mxu0 0.0
    %234 = vmatpush2.msra.mxu0 0.0
    %235 = vmatprep.subr.mxu0 0.0
    %236 = vmatpush2.msra.mxu0 0.0
    %237 = vmatprep.subr.mxu0 0.0
    %238 = vmatpush2.msra.mxu0 0.0
    %239 = vmatprep.subr.mxu0 0.0
    %240 = vmatpush2.msra.mxu0 0.0
    %241 = vmatprep.subr.mxu0 0.0
    %242 = vmatpush2.msra.mxu0 0.0
    %243 = vmatprep.subr.mxu0 0.0
    %244 = vmatpush2.msra.mxu0 0.0
    %245 = vmatprep.subr.mxu0 0.0
    %246 = vmatpush2.msra.mxu0 0.0
    %247 = vmatprep.subr.mxu0 0.0
    %248 = vmatpush2.msra.mxu0 0.0
    %249 = vmatprep.subr.mxu0 0.0
    %250 = vmatpush2.msra.mxu0 0.0
    %251 = vmatprep.subr.mxu0 0.0
    %252 = vmatpush2.msra.mxu0 0.0
    %253 = vmatprep.subr.mxu0 0.0
    %254 = vmatpush2.msra.mxu0 0.0
    %255 = vmatprep.subr.mxu0 0.0
    %256 = vmatpush2.msra.mxu0 0.0
    %257 = vmatprep.subr.mxu0 0.0
    %258 = vmatpush2.msra.mxu0 0.0
    %259 = vmatprep.mubr.f32.mxu0 0.0
    %260 = vmatmul.mubr.f32.gmra.mxu0 %v193
    %v261 = vpop.f32.mrf.mxu0
    %v262 = vadd.f32 0.0, %v261
    %v263 = vpop.f32.mrf.mxu0
    %264 = vdwg.mxu0
    %v265 = vadd.f32 %v186, %v262
    %267 = vset.pattern.permute.xlu0 0
    %268 = vperm.xlu0 %267, %v35
    %v269 = vpop.permute.xlu0 %268
    %v271 = vmul.f32 %v265, %v269
    %273 = vset.pattern.permute.xlu0 0
    %274 = vperm.xlu0 %273, %v36
    %v275 = vpop.permute.xlu0 %274
    %v277 = vadd.f32 %v271, %v275
    %v278 = vmax.f32 %v277, 0.0
    %v279 = vadd.f32 %v278, %v40
    %vm280 = vcmask 130048
    %281 = vst.msk [vmem:[#allocation5] sm:$0xff] %vm280, %v279
    %s282 = scalar_lea.vmem %s0, 8
    %v283 = vld [vmem:[%s282] sm:$0xff]
    %285 = vrot.lane.b32.xlu0 %v283, 127
    %v286 = vpop.permute.xlu0 %285
    %288 = vmatprep.subr.mxu0 0.0
    %289 = vmatpush1.msra.mxu0 0.0
    %290 = vmatprep.subr.mxu0 0.0
    %291 = vmatpush1.msra.mxu0 0.0
    %292 = vmatprep.subr.mxu0 0.0
    %293 = vmatpush1.msra.mxu0 0.0
    %294 = vmatprep.subr.mxu0 0.0
    %295 = vmatpush1.msra.mxu0 0.0
    %296 = vmatprep.subr.mxu0 0.0
    %297 = vmatpush1.msra.mxu0 0.0
    %298 = vmatprep.subr.mxu0 0.0
    %299 = vmatpush1.msra.mxu0 0.0
    %300 = vmatprep.subr.mxu0 0.0
    %301 = vmatpush1.msra.mxu0 0.0
    %302 = vmatprep.subr.mxu0 0.0
    %303 = vmatpush1.msra.mxu0 0.0
    %304 = vmatprep.subr.mxu0 0.0
    %305 = vmatpush1.msra.mxu0 0.0
    %306 = vmatprep.subr.mxu0 0.0
    %307 = vmatpush1.msra.mxu0 0.0
    %308 = vmatprep.subr.mxu0 0.0
    %309 = vmatpush1.msra.mxu0 0.0
    %310 = vmatprep.subr.mxu0 0.0
    %311 = vmatpush1.msra.mxu0 0.0
    %312 = vmatprep.subr.mxu0 0.0
    %313 = vmatpush1.msra.mxu0 0.0
    %314 = vmatprep.subr.mxu0 0.0
    %315 = vmatpush1.msra.mxu0 0.0
    %316 = vmatprep.subr.mxu0 0.0
    %317 = vmatpush1.msra.mxu0 0.0
    %318 = vmatprep.subr.mxu0 0.0
    %319 = vmatpush1.msra.mxu0 %v286
    %320 = vmatprep.subr.mxu0 0.0
    %321 = vmatpush2.msra.mxu0 0.0
    %322 = vmatprep.subr.mxu0 0.0
    %323 = vmatpush2.msra.mxu0 0.0
    %324 = vmatprep.subr.mxu0 0.0
    %325 = vmatpush2.msra.mxu0 0.0
    %326 = vmatprep.subr.mxu0 0.0
    %327 = vmatpush2.msra.mxu0 0.0
    %328 = vmatprep.subr.mxu0 0.0
    %329 = vmatpush2.msra.mxu0 0.0
    %330 = vmatprep.subr.mxu0 0.0
    %331 = vmatpush2.msra.mxu0 0.0
    %332 = vmatprep.subr.mxu0 0.0
    %333 = vmatpush2.msra.mxu0 0.0
    %334 = vmatprep.subr.mxu0 0.0
    %335 = vmatpush2.msra.mxu0 0.0
    %336 = vmatprep.subr.mxu0 0.0
    %337 = vmatpush2.msra.mxu0 0.0
    %338 = vmatprep.subr.mxu0 0.0
    %339 = vmatpush2.msra.mxu0 0.0
    %340 = vmatprep.subr.mxu0 0.0
    %341 = vmatpush2.msra.mxu0 0.0
    %342 = vmatprep.subr.mxu0 0.0
    %343 = vmatpush2.msra.mxu0 0.0
    %344 = vmatprep.subr.mxu0 0.0
    %345 = vmatpush2.msra.mxu0 0.0
    %346 = vmatprep.subr.mxu0 0.0
    %347 = vmatpush2.msra.mxu0 0.0
    %348 = vmatprep.subr.mxu0 0.0
    %349 = vmatpush2.msra.mxu0 0.0
    %350 = vmatprep.subr.mxu0 0.0
    %351 = vmatpush2.msra.mxu0 0.0
    %352 = vmatprep.mubr.f32.mxu0 0.0
    %353 = vmatmul.mubr.f32.gmra.mxu0 %v44
    %v354 = vpop.f32.mrf.mxu0
    %v355 = vadd.f32 0.0, %v354
    %v356 = vpop.f32.mrf.mxu0
    %357 = vdwg.mxu0
    %358 = vmatprep.subr.mxu0 0.0
    %359 = vmatpush1.msra.mxu0 0.0
    %360 = vmatprep.subr.mxu0 0.0
    %361 = vmatpush1.msra.mxu0 0.0
    %362 = vmatprep.subr.mxu0 0.0
    %363 = vmatpush1.msra.mxu0 0.0
    %364 = vmatprep.subr.mxu0 0.0
    %365 = vmatpush1.msra.mxu0 0.0
    %366 = vmatprep.subr.mxu0 0.0
    %367 = vmatpush1.msra.mxu0 0.0
    %368 = vmatprep.subr.mxu0 0.0
    %369 = vmatpush1.msra.mxu0 0.0
    %370 = vmatprep.subr.mxu0 0.0
    %371 = vmatpush1.msra.mxu0 0.0
    %372 = vmatprep.subr.mxu0 0.0
    %373 = vmatpush1.msra.mxu0 0.0
    %374 = vmatprep.subr.mxu0 0.0
    %375 = vmatpush1.msra.mxu0 0.0
    %376 = vmatprep.subr.mxu0 0.0
    %377 = vmatpush1.msra.mxu0 0.0
    %378 = vmatprep.subr.mxu0 0.0
    %379 = vmatpush1.msra.mxu0 0.0
    %380 = vmatprep.subr.mxu0 0.0
    %381 = vmatpush1.msra.mxu0 0.0
    %382 = vmatprep.subr.mxu0 0.0
    %383 = vmatpush1.msra.mxu0 0.0
    %384 = vmatprep.subr.mxu0 0.0
    %385 = vmatpush1.msra.mxu0 0.0
    %386 = vmatprep.subr.mxu0 0.0
    %387 = vmatpush1.msra.mxu0 0.0
    %388 = vmatprep.subr.mxu0 0.0
    %389 = vmatpush1.msra.mxu0 %v283
    %390 = vmatprep.subr.mxu0 0.0
    %391 = vmatpush2.msra.mxu0 0.0
    %392 = vmatprep.subr.mxu0 0.0
    %393 = vmatpush2.msra.mxu0 0.0
    %394 = vmatprep.subr.mxu0 0.0
    %395 = vmatpush2.msra.mxu0 0.0
    %396 = vmatprep.subr.mxu0 0.0
    %397 = vmatpush2.msra.mxu0 0.0
    %398 = vmatprep.subr.mxu0 0.0
    %399 = vmatpush2.msra.mxu0 0.0
    %400 = vmatprep.subr.mxu0 0.0
    %401 = vmatpush2.msra.mxu0 0.0
    %402 = vmatprep.subr.mxu0 0.0
    %403 = vmatpush2.msra.mxu0 0.0
    %404 = vmatprep.subr.mxu0 0.0
    %405 = vmatpush2.msra.mxu0 0.0
    %406 = vmatprep.subr.mxu0 0.0
    %407 = vmatpush2.msra.mxu0 0.0
    %408 = vmatprep.subr.mxu0 0.0
    %409 = vmatpush2.msra.mxu0 0.0
    %410 = vmatprep.subr.mxu0 0.0
    %411 = vmatpush2.msra.mxu0 0.0
    %412 = vmatprep.subr.mxu0 0.0
    %413 = vmatpush2.msra.mxu0 0.0
    %414 = vmatprep.subr.mxu0 0.0
    %415 = vmatpush2.msra.mxu0 0.0
    %416 = vmatprep.subr.mxu0 0.0
    %417 = vmatpush2.msra.mxu0 0.0
    %418 = vmatprep.subr.mxu0 0.0
    %419 = vmatpush2.msra.mxu0 0.0
    %420 = vmatprep.subr.mxu0 0.0
    %421 = vmatpush2.msra.mxu0 0.0
    %422 = vmatprep.mubr.f32.mxu0 0.0
    %423 = vmatmul.mubr.f32.gmra.mxu0 %v117
    %v424 = vpop.f32.mrf.mxu0
    %v425 = vadd.f32 %v355, %v424
    %v426 = vpop.f32.mrf.mxu0
    %427 = vdwg.mxu0
    %428 = vrot.lane.b32.xlu0 %v283, 126
    %v429 = vpop.permute.xlu0 %428
    %431 = vmatprep.subr.mxu0 0.0
    %432 = vmatpush1.msra.mxu0 0.0
    %433 = vmatprep.subr.mxu0 0.0
    %434 = vmatpush1.msra.mxu0 0.0
    %435 = vmatprep.subr.mxu0 0.0
    %436 = vmatpush1.msra.mxu0 0.0
    %437 = vmatprep.subr.mxu0 0.0
    %438 = vmatpush1.msra.mxu0 0.0
    %439 = vmatprep.subr.mxu0 0.0
    %440 = vmatpush1.msra.mxu0 0.0
    %441 = vmatprep.subr.mxu0 0.0
    %442 = vmatpush1.msra.mxu0 0.0
    %443 = vmatprep.subr.mxu0 0.0
    %444 = vmatpush1.msra.mxu0 0.0
    %445 = vmatprep.subr.mxu0 0.0
    %446 = vmatpush1.msra.mxu0 0.0
    %447 = vmatprep.subr.mxu0 0.0
    %448 = vmatpush1.msra.mxu0 0.0
    %449 = vmatprep.subr.mxu0 0.0
    %450 = vmatpush1.msra.mxu0 0.0
    %451 = vmatprep.subr.mxu0 0.0
    %452 = vmatpush1.msra.mxu0 0.0
    %453 = vmatprep.subr.mxu0 0.0
    %454 = vmatpush1.msra.mxu0 0.0
    %455 = vmatprep.subr.mxu0 0.0
    %456 = vmatpush1.msra.mxu0 0.0
    %457 = vmatprep.subr.mxu0 0.0
    %458 = vmatpush1.msra.mxu0 0.0
    %459 = vmatprep.subr.mxu0 0.0
    %460 = vmatpush1.msra.mxu0 0.0
    %461 = vmatprep.subr.mxu0 0.0
    %462 = vmatpush1.msra.mxu0 %v429
    %463 = vmatprep.subr.mxu0 0.0
    %464 = vmatpush2.msra.mxu0 0.0
    %465 = vmatprep.subr.mxu0 0.0
    %466 = vmatpush2.msra.mxu0 0.0
    %467 = vmatprep.subr.mxu0 0.0
    %468 = vmatpush2.msra.mxu0 0.0
    %469 = vmatprep.subr.mxu0 0.0
    %470 = vmatpush2.msra.mxu0 0.0
    %471 = vmatprep.subr.mxu0 0.0
    %472 = vmatpush2.msra.mxu0 0.0
    %473 = vmatprep.subr.mxu0 0.0
    %474 = vmatpush2.msra.mxu0 0.0
    %475 = vmatprep.subr.mxu0 0.0
    %476 = vmatpush2.msra.mxu0 0.0
    %477 = vmatprep.subr.mxu0 0.0
    %478 = vmatpush2.msra.mxu0 0.0
    %479 = vmatprep.subr.mxu0 0.0
    %480 = vmatpush2.msra.mxu0 0.0
    %481 = vmatprep.subr.mxu0 0.0
    %482 = vmatpush2.msra.mxu0 0.0
    %483 = vmatprep.subr.mxu0 0.0
    %484 = vmatpush2.msra.mxu0 0.0
    %485 = vmatprep.subr.mxu0 0.0
    %486 = vmatpush2.msra.mxu0 0.0
    %487 = vmatprep.subr.mxu0 0.0
    %488 = vmatpush2.msra.mxu0 0.0
    %489 = vmatprep.subr.mxu0 0.0
    %490 = vmatpush2.msra.mxu0 0.0
    %491 = vmatprep.subr.mxu0 0.0
    %492 = vmatpush2.msra.mxu0 0.0
    %493 = vmatprep.subr.mxu0 0.0
    %494 = vmatpush2.msra.mxu0 0.0
    %495 = vmatprep.mubr.f32.mxu0 0.0
    %496 = vmatmul.mubr.f32.gmra.mxu0 %v193
    %v497 = vpop.f32.mrf.mxu0
    %v498 = vadd.f32 0.0, %v497
    %v499 = vpop.f32.mrf.mxu0
    %500 = vdwg.mxu0
    %v501 = vadd.f32 %v425, %v498
    %v502 = vmul.f32 %v501, %v269
    %v503 = vadd.f32 %v502, %v275
    %v504 = vmax.f32 %v503, 0.0
    %v505 = vadd.f32 %v504, %v286
    %s506 = scalar_lea.vmem [#allocation5], 8
    %507 = vst.msk [vmem:[%s506] sm:$0xff] %vm280, %v505
    // Predicated region
    $region22: #{tpu_custom_call.1} parent=1 // pred_check
      _
    $region23: #{tpu_custom_call.1} parent=1 // pred_check_branch
      %509 = sbr.rel (0) target = $region25
    $region24: #{tpu_custom_call.1} parent=1 // pred_region
      %s511 = ssub.s32 256, 256
      %512 = vsyncadd [#allocation4], %s511
      %s513 = sshll.u32 [#allocation5], 4
      %s514 = int_to_ptr.vmem [resolvable:$true] %s513
      %519 = dma.vmem_to_hbm [thread:$0]  %s514, 256, %s4, [#allocation4], 128, 128, 8
    $region25: #{tpu_custom_call.1} parent=1 // pred_fallthru
      _
    // Predicated region
    $region26: #{tpu_custom_call.1} parent=1 // pred_check
      _
    $region27: #{tpu_custom_call.1} parent=1 // pred_check_branch
      %521 = sbr.rel (0) target = $region29
    $region28: #{tpu_custom_call.1} parent=1 // pred_region
      %522 = dma.done [#allocation4], 256
    $region29: #{tpu_custom_call.1} parent=1 // pred_fallthru
      _
    %523 = vsyncpa [#allocation3], 1
    %524 = vsyncpa [#allocation4], 1

</llo_original>
